<compile_context>
chip_gen: v7x
topology: tpu7x:2x2x1
jax: 0.10.0
libtpu: 0.0.40
codegen_flags: <defaults>
</compile_context>

<pallas_src>
import functools

import jax
import jax.numpy as jnp
from jax import lax
from jax.experimental import pallas as pl
from jax.experimental.pallas import tpu as pltpu


def _focal_weight(one_minus_pt, gamma):
    """(1 - pt)**gamma, specialized to repeated multiplies for integer gamma."""
    g = float(gamma)
    if g == int(g) and g >= 0:
        gi = int(g)
        if gi == 0:
            return jnp.ones_like(one_minus_pt)
        w = one_minus_pt
        for _ in range(gi - 1):
            w = w * one_minus_pt
        return w
    return one_minus_pt ** g


def _focal_cosine_kernel(x_ref, t_ref, o_ref, acc_ref, *,
                         alpha, gamma, xent, n_rows, block_rows):
    i = pl.program_id(0)

    @pl.when(i == 0)
    def _init():
        acc_ref[0] = 0.0

    x = x_ref[...].astype(jnp.float32)          # (TM, C)
    t = t_ref[...]                              # (TM, 1) int32
    tm, c = x.shape

    # mask for padded rows of the last (ragged) tile
    row = lax.broadcasted_iota(jnp.int32, (tm, 1), 0)
    valid = (i * block_rows + row) < n_rows     # (TM, 1) bool

    # target logit x[i, target_i] via iota compare (no gather, no one-hot temp)
    col = lax.broadcasted_iota(jnp.int32, (tm, c), 1)
    x_t = jnp.sum(jnp.where(col == t, x, 0.0), axis=-1, keepdims=True)

    # per-row L2 norm; one (TM,1) reciprocal instead of (TM,C) divides
    norm = jnp.sqrt(jnp.sum(x * x, axis=-1, keepdims=True))
    inv_cos = 1.0 / jnp.maximum(norm, 1e-8)     # cosine_embedding_loss clamp
    inv_nrm = 1.0 / jnp.maximum(norm, 1e-12)    # F.normalize clamp

    # cosine embedding loss (y = +1), ||onehot|| == 1
    cosine_per = 1.0 - x_t * inv_cos            # (TM, 1)

    # cross entropy on L2-normalized logits
    z = x * inv_nrm
    m = jnp.max(z, axis=-1, keepdims=True)
    lse = m + jnp.log(jnp.sum(jnp.exp(z - m), axis=-1, keepdims=True))
    cent = lse - x_t * inv_nrm                  # (TM, 1)

    one_minus_pt = 1.0 - jnp.exp(-cent)
    focal = alpha * _focal_weight(one_minus_pt, gamma) * cent

    per_row = cosine_per + xent * focal
    acc_ref[0] += jnp.sum(jnp.where(valid, per_row, 0.0))

    @pl.when(i == pl.num_programs(0) - 1)
    def _finalize():
        o_ref[0] = acc_ref[0] * (1.0 / n_rows)  # mean over the GLOBAL N


def _choose_block_rows(n, c):
    # Target ~2 MiB for the f32 working tile so double-buffered inputs plus
    # the handful of live (TM, C) f32 temps stay far below the scoped VMEM
    # limit on v5e/v6e and v7x (64 MiB physical), while tiles of 512-1024
    # rows amortize the ~0.35 us per-grid-step overhead.
    bytes_per_row_f32 = max(c, 128) * 4
    tm = (2 * 1024 * 1024) // bytes_per_row_f32
    tm = max(8, min(1024, (tm // 8) * 8))       # (8, 128) sublane alignment
    n_pad = ((n + 7) // 8) * 8
    return min(tm, n_pad)


def focal_cosine_loss(inputs, targets, *, alpha=1.0, gamma=2.0, xent=0.1,
                      block_rows=None):
    """inputs: (N, C) float (any float dtype), targets: (N,) int. Scalar f32."""
    n, c = inputs.shape
    if block_rows is None:
        block_rows = _choose_block_rows(n, c)
    assert block_rows % 8 == 0
    grid = (pl.cdiv(n, block_rows),)
    targets_2d = targets.astype(jnp.int32).reshape(n, 1)

    out = pl.pallas_call(
        functools.partial(
            _focal_cosine_kernel,
            alpha=float(alpha), gamma=float(gamma), xent=float(xent),
            n_rows=n, block_rows=block_rows),
        out_shape=jax.ShapeDtypeStruct((1,), jnp.float32),
        grid=grid,
        in_specs=[
            pl.BlockSpec((block_rows, c), lambda i: (i, 0)),   # logits tile
            pl.BlockSpec((block_rows, 1), lambda i: (i, 0)),   # targets tile
        ],
        out_specs=pl.BlockSpec(memory_space=pltpu.SMEM),       # resident scalar
        scratch_shapes=[pltpu.SMEM((1,), jnp.float32)],        # running sum
        compiler_params=pltpu.CompilerParams(
            dimension_semantics=("arbitrary",)),               # reduction axis
    )(inputs, targets_2d)
    return out[0]


def _reference(inputs, targets, alpha=1.0, gamma=2.0, xent=0.1):
    x = inputs.astype(jnp.float32)
    n, c = x.shape
    onehot = jax.nn.one_hot(targets, c, dtype=jnp.float32)
    norm = jnp.linalg.norm(x, axis=-1, keepdims=True)
    dot = jnp.sum(x * onehot, axis=-1, keepdims=True)
    cosine_loss = jnp.mean(1.0 - dot / jnp.maximum(norm, 1e-8))
    z = x / jnp.maximum(norm, 1e-12)
    cent = jax.nn.logsumexp(z, axis=-1) - jnp.take_along_axis(
        z, targets[:, None], axis=-1)[:, 0]
    pt = jnp.exp(-cent)
    focal = jnp.mean(alpha * (1.0 - pt) ** gamma * cent)
    return cosine_loss + xent * focal


if __name__ == "__main__":
    key = jax.random.PRNGKey(0)
    k1, k2, k3, k4 = jax.random.split(key, 4)

    # small shapes consistent with the module: batch of logits over C classes
    N, C = 8, 32
    x = jax.random.normal(k1, (N, C), dtype=jnp.float32)
    t = jax.random.randint(k2, (N,), 0, C, dtype=jnp.int32)
    loss = focal_cosine_loss(x, t, alpha=1.0, gamma=2.0, xent=0.1)
    jax.block_until_ready(loss)
    ref = _reference(x, t)
    assert jnp.allclose(loss, ref, rtol=1e-5, atol=1e-6), (loss, ref)

    # multi-tile + ragged last tile: exercises accumulator + row masking
    N2, C2 = 300, 160
    x2 = jax.random.normal(k3, (N2, C2), dtype=jnp.float32)
    t2 = jax.random.randint(k4, (N2,), 0, C2, dtype=jnp.int32)
    loss2 = focal_cosine_loss(x2, t2, block_rows=128)
    jax.block_until_ready(loss2)
    ref2 = _reference(x2, t2)
    assert jnp.allclose(loss2, ref2, rtol=1e-5, atol=1e-5), (loss2, ref2)

    print("KERNEL_OK")
</pallas_src>

<mosaic_0001>
module attributes {stable_mosaic.version = 11 : i64} {
  func.func @_focal_cosine_kernel(%arg0: i32, %arg1: memref<8x32xf32, #tpu.memory_space<vmem>>, %arg2: memref<8x1xi32, #tpu.memory_space<vmem>>, %arg3: memref<1xf32, #tpu.memory_space<smem>>, %arg4: memref<1xf32, #tpu.memory_space<smem>>) attributes {dimension_semantics = [#tpu.dimension_semantics<arbitrary>], iteration_bounds = array<i64: 1>, scalar_prefetch = 0 : i64, scratch_operands = 1 : i64, tpu.core_type = #tpu.core_type<tc>, window_params = [{transform_indices = @transform_0, window_bounds = array<i64: 8, 32>}, {transform_indices = @transform_1, window_bounds = array<i64: 8, 1>}, {transform_indices = @transform_2, window_bounds = array<i64: 1>}]} {
    %c0_i32 = arith.constant 0 : i32
    %0 = arith.cmpi eq, %arg0, %c0_i32 : i32
    %1 = arith.extui %0 : i1 to i32
    %c0_i32_0 = arith.constant 0 : i32
    %2 = arith.cmpi ne, %1, %c0_i32_0 : i32
    scf.if %2 {
      %cst_24 = arith.constant 0.000000e+00 : f32
      %c0_25 = arith.constant 0 : index
      %70 = memref.load %arg4[%c0_25] : memref<1xf32, #tpu.memory_space<smem>>
      memref.store %cst_24, %arg4[%c0_25] : memref<1xf32, #tpu.memory_space<smem>>
    } else {
    }
    %c0 = arith.constant 0 : index
    %c0_1 = arith.constant 0 : index
    %3 = vector.load %arg1[%c0, %c0_1] : memref<8x32xf32, #tpu.memory_space<vmem>>, vector<8x32xf32>
    %c0_2 = arith.constant 0 : index
    %c0_3 = arith.constant 0 : index
    %4 = vector.load %arg2[%c0_2, %c0_3] : memref<8x1xi32, #tpu.memory_space<vmem>>, vector<8x1xi32>
    %5 = tpu.iota {dimensions = array<i32: 0>} : vector<8x1xi32>
    %c8_i32 = arith.constant 8 : i32
    %6 = arith.muli %arg0, %c8_i32 : i32
    %7 = vector.broadcast %6 : i32 to vector<8x1xi32>
    %8 = arith.addi %7, %5 : vector<8x1xi32>
    %c8_i32_4 = arith.constant 8 : i32
    %9 = vector.broadcast %c8_i32_4 : i32 to vector<8x1xi32>
    %10 = arith.cmpi slt, %8, %9 : vector<8x1xi32>
    %11 = tpu.iota {dimensions = array<i32: 1>} : vector<8x32xi32>
    %12 = vector.broadcast %4 : vector<8x1xi32> to vector<8x32xi32>
    %13 = arith.cmpi eq, %11, %12 : vector<8x32xi32>
    %cst = arith.constant 0.000000e+00 : f32
    %14 = vector.broadcast %cst : f32 to vector<8x32xf32>
    %15 = arith.select %13, %3, %14 : vector<8x32xi1>, vector<8x32xf32>
    %cst_5 = arith.constant dense<0.000000e+00> : vector<8xf32>
    %16 = vector.multi_reduction <add>, %15, %cst_5 [1] : vector<8x32xf32> to vector<8xf32>
    %17 = vector.shape_cast %16 : vector<8xf32> to vector<8x1xf32>
    %18 = arith.mulf %3, %3 : vector<8x32xf32>
    %cst_6 = arith.constant dense<0.000000e+00> : vector<8xf32>
    %19 = vector.multi_reduction <add>, %18, %cst_6 [1] : vector<8x32xf32> to vector<8xf32>
    %20 = vector.shape_cast %19 : vector<8xf32> to vector<8x1xf32>
    %21 = math.sqrt %20 : vector<8x1xf32>
    %cst_7 = arith.constant 9.99999993E-9 : f32
    %22 = vector.broadcast %cst_7 : f32 to vector<8x1xf32>
    %23 = arith.maximumf %21, %22 : vector<8x1xf32>
    %cst_8 = arith.constant 1.000000e+00 : f32
    %24 = vector.broadcast %cst_8 : f32 to vector<8x1xf32>
    %25 = arith.divf %24, %23 : vector<8x1xf32>
    %cst_9 = arith.constant 9.99999996E-13 : f32
    %26 = vector.broadcast %cst_9 : f32 to vector<8x1xf32>
    %27 = arith.maximumf %21, %26 : vector<8x1xf32>
    %cst_10 = arith.constant 1.000000e+00 : f32
    %28 = vector.broadcast %cst_10 : f32 to vector<8x1xf32>
    %29 = arith.divf %28, %27 : vector<8x1xf32>
    %30 = arith.mulf %17, %25 : vector<8x1xf32>
    %cst_11 = arith.constant 1.000000e+00 : f32
    %31 = vector.broadcast %cst_11 : f32 to vector<8x1xf32>
    %32 = arith.subf %31, %30 : vector<8x1xf32>
    %33 = vector.broadcast %29 : vector<8x1xf32> to vector<8x32xf32>
    %34 = arith.mulf %3, %33 : vector<8x32xf32>
    %cst_12 = arith.constant dense<0xFF800000> : vector<8xf32>
    %35 = vector.multi_reduction <maximumf>, %34, %cst_12 [1] : vector<8x32xf32> to vector<8xf32>
    %36 = vector.shape_cast %35 : vector<8xf32> to vector<8x1xf32>
    %37 = vector.broadcast %36 : vector<8x1xf32> to vector<8x32xf32>
    %38 = arith.subf %34, %37 : vector<8x32xf32>
    %39 = math.exp %38 : vector<8x32xf32>
    %cst_13 = arith.constant dense<0.000000e+00> : vector<8xf32>
    %40 = vector.multi_reduction <add>, %39, %cst_13 [1] : vector<8x32xf32> to vector<8xf32>
    %41 = vector.shape_cast %40 : vector<8xf32> to vector<8x1xf32>
    %42 = math.log %41 : vector<8x1xf32>
    %43 = arith.addf %36, %42 : vector<8x1xf32>
    %44 = arith.mulf %17, %29 : vector<8x1xf32>
    %45 = arith.subf %43, %44 : vector<8x1xf32>
    %cst_14 = arith.constant 0.000000e+00 : f32
    %46 = vector.broadcast %cst_14 : f32 to vector<8x1xf32>
    %47 = arith.subf %46, %45 : vector<8x1xf32>
    %48 = math.exp %47 : vector<8x1xf32>
    %cst_15 = arith.constant 1.000000e+00 : f32
    %49 = vector.broadcast %cst_15 : f32 to vector<8x1xf32>
    %50 = arith.subf %49, %48 : vector<8x1xf32>
    %51 = arith.mulf %50, %50 : vector<8x1xf32>
    %cst_16 = arith.constant 1.000000e+00 : f32
    %52 = vector.broadcast %cst_16 : f32 to vector<8x1xf32>
    %53 = arith.mulf %52, %51 : vector<8x1xf32>
    %54 = arith.mulf %53, %45 : vector<8x1xf32>
    %cst_17 = arith.constant 1.000000e-01 : f32
    %55 = vector.broadcast %cst_17 : f32 to vector<8x1xf32>
    %56 = arith.mulf %55, %54 : vector<8x1xf32>
    %57 = arith.addf %32, %56 : vector<8x1xf32>
    %c0_18 = arith.constant 0 : index
    %58 = memref.load %arg4[%c0_18] : memref<1xf32, #tpu.memory_space<smem>>
    %cst_19 = arith.constant 0.000000e+00 : f32
    %59 = vector.broadcast %cst_19 : f32 to vector<8x1xf32>
    %60 = arith.select %10, %57, %59 : vector<8x1xi1>, vector<8x1xf32>
    %61 = vector.shape_cast %60 : vector<8x1xf32> to vector<1x8x1xf32>
    %cst_20 = arith.constant dense<0.000000e+00> : vector<1xf32>
    %62 = vector.multi_reduction <add>, %61, %cst_20 [1, 2] : vector<1x8x1xf32> to vector<1xf32>
    %63 = vector.shape_cast %62 : vector<1xf32> to vector<1x1x1xf32>
    %64 = vector.extract %63[0, 0, 0] : f32 from vector<1x1x1xf32>
    %65 = arith.addf %58, %64 : f32
    %c0_21 = arith.constant 0 : index
    %66 = memref.load %arg4[%c0_21] : memref<1xf32, #tpu.memory_space<smem>>
    memref.store %65, %arg4[%c0_21] : memref<1xf32, #tpu.memory_space<smem>>
    %c0_i32_22 = arith.constant 0 : i32
    %67 = arith.cmpi eq, %arg0, %c0_i32_22 : i32
    %68 = arith.extui %67 : i1 to i32
    %c0_i32_23 = arith.constant 0 : i32
    %69 = arith.cmpi ne, %68, %c0_i32_23 : i32
    scf.if %69 {
      %c0_24 = arith.constant 0 : index
      %70 = memref.load %arg4[%c0_24] : memref<1xf32, #tpu.memory_space<smem>>
      %cst_25 = arith.constant 1.250000e-01 : f32
      %71 = arith.mulf %70, %cst_25 : f32
      %c0_26 = arith.constant 0 : index
      %72 = memref.load %arg3[%c0_26] : memref<1xf32, #tpu.memory_space<smem>>
      memref.store %71, %arg3[%c0_26] : memref<1xf32, #tpu.memory_space<smem>>
    } else {
    }
    return
  }
  func.func @transform_0(%arg0: i32) -> (i32, i32) {
    %c0_i32 = arith.constant 0 : i32
    %c0_i32_0 = arith.constant 0 : i32
    return %arg0, %c0_i32 : i32, i32
  }
  func.func @transform_1(%arg0: i32) -> (i32, i32) {
    %c0_i32 = arith.constant 0 : i32
    %c0_i32_0 = arith.constant 0 : i32
    return %arg0, %c0_i32 : i32, i32
  }
  func.func @transform_2(%arg0: i32) -> i32 {
    %c0_i32 = arith.constant 0 : i32
    %c0_i32_0 = arith.constant 0 : i32
    return %c0_i32 : i32
  }
}

</mosaic_0001>

<llo_original>
// kernel: tpu_custom_call.1
$region0: #{tpu_custom_call.1}
  #allocation0 [shape = 'u32[]', space=smem, size = 0x4, offset = 0x4, fixed_abs, tag = 'smem constant byte address 0x4 - core index']
  #allocation1 [shape = 'u32[144,128]{1,0:T(1,128)}', space=vmem, size = 0x12000, scoped, tag = 'internal scratch']
  #allocation2 [shape = 'f32[1]{0:T(128)}', space=smem, size = 0x200, scoped, tag = 'scratch operand']
  %s0 = inlined_call_operand.vmem [shape: f32[8,32], index: 0, kind: input, shape index: {}]
  %s1 = inlined_call_operand.vmem [shape: s32[8,1], index: 1, kind: input, shape index: {}]
  %s2 = inlined_call_operand.hbm [shape: f32[1], index: 2, kind: output, shape index: {}]
  %s3 = sld [smem:[#allocation0]]
  $region26: #{tpu_custom_call.1} parent=0
    _
  %s5 = ssub.s32 1, %s3
  %s6 = scalar_select 0, %s5, %s3
  $region1: #{tpu_custom_call.1} parent=0
    #allocation3 [shape = 'u8[512]{0}', space=smem, size = 0x200, scoped, tag = 'output window, operand 0, single buffered']
    #allocation4 [shape = 's32[1]{0}', space=sflag, size = 0x4, scoped, tag = 'scoped memory for tpu_custom_call.1']
    %7 = vsyncpa [#allocation4], 0
    // Predicated region
    $region2: #{tpu_custom_call.1} parent=1 // pred_check
      _
    $region3: #{tpu_custom_call.1} parent=1 // pred_check_branch
      %9 = sbr.rel (0) target = $region5
    $region4: #{tpu_custom_call.1} parent=1 // pred_region
      _
    $region5: #{tpu_custom_call.1} parent=1 // pred_fallthru
      _
    // Predicated region
    $region6: #{tpu_custom_call.1} parent=1 // pred_check
      _
    $region7: #{tpu_custom_call.1} parent=1 // pred_check_branch
      %11 = sbr.rel (0) target = $region9
    $region8: #{tpu_custom_call.1} parent=1 // pred_region
      _
    $region9: #{tpu_custom_call.1} parent=1 // pred_fallthru
      _
    %p12 = scmp.eq.s32.totalorder 0, 0
    // Predicated region
    $region10: #{tpu_custom_call.1} parent=1 // pred_check
      %p13 = pneg %p12
    $region11: #{tpu_custom_call.1} parent=1 // pred_check_branch
      %15 = sbr.rel (%p13) target = $region13
    $region12: #{tpu_custom_call.1} parent=1 // pred_region
      %s16 = scalar_lea.smem [#allocation2], 0
      %17 = sst [smem:[%s16]] 0.0
    $region13: #{tpu_custom_call.1} parent=1 // pred_fallthru
      _
    %v18 = vld [vmem:[%s0] sm:$0xff]
    %v19 = vld [vmem:[%s1] sm:$0xff]
    %v20 = vlaneseq
    %v21 = vshrl.u32 %v20, 7
    %s22 = smul.u32 0, 8
    %v23 = vstv %s22
    %v24 = vadd.s32 %v23, %v21
    %vm25 = vcmp.lt.s32.totalorder %v24, 8
    %v26 = vlaneseq
    %v27 = vand.u32 %v26, 127
    %28 = vset.pattern.permute.xlu0 0
    %29 = vperm.xlu0 %28, %v19
    %v30 = vpop.permute.xlu0 %29
    %vm31 = vcmp.eq.s32.totalorder %v27, %v30
    %v32 = vsel %vm31, %v18, 0.0
    %vm33 = vcmask 261120
    %v34 = vsel %vm33, %v32, 0.0
    %35 = vadd.xlane.f32.xlu0 %v34
    %v36 = vpop.xlane.xlu0 %35
    %v37 = vmul.f32 %v18, %v18
    %v38 = vsel %vm33, %v37, 0.0
    %39 = vadd.xlane.f32.xlu0 %v38
    %v40 = vpop.xlane.xlu0 %39
    %v41 = vrsqrt.pop %v40
    %v42 = vmul.f32 %v40, %v41
    %vm43 = vcmp.eq.f32.partialorder %v40, inf
    %v44 = vsel %vm43, %v40, %v42
    %vm45 = vcmp.eq.f32.partialorder %v40, 0.0
    %v46 = vand.u32 %v40, 2147483648
    %v47 = vsel %vm45, %v46, %v44
    %v48 = vmax.f32 %v47, 1e-08
    %v49 = vrcp.pop %v48
    %v50 = vmul.f32 1.0, %v49
    %v51 = vmax.f32 %v47, 1e-12
    %v52 = vrcp.pop %v51
    %v53 = vmul.f32 1.0, %v52
    %v54 = vmul.f32 %v36, %v50
    %v55 = vsub.f32 1.0, %v54
    %v56 = vmul.f32 %v18, %v53
    %v57 = vsel %vm33, %v56, -inf
    %58 = vmax.xlane.f32.xlu0 %v57
    %v59 = vpop.xlane.xlu0 %58
    %v60 = vsub.f32 %v56, %v59
    %v61 = vmul.f32 %v60, 1.442695
    %v62 = vpow.pop %v61
    %v63 = vsel %vm33, %v62, 0.0
    %64 = vadd.xlane.f32.xlu0 %v63
    %v65 = vpop.xlane.xlu0 %64
    %v66 = vlog2.pop %v65
    %v67 = vmul.f32 %v66, 0.6931472
    %v68 = vadd.f32 %v59, %v67
    %v69 = vmul.f32 %v36, %v53
    %v70 = vsub.f32 %v68, %v69
    %v71 = vsub.f32 0.0, %v70
    %v72 = vmul.f32 %v71, 1.442695
    %v73 = vpow.pop %v72
    %v74 = vsub.f32 1.0, %v73
    %v75 = vmul.f32 %v74, %v74
    %v76 = vmul.f32 %v75, %v70
    %v77 = vmul.f32 %v76, 0.1
    %v78 = vadd.f32 %v55, %v77
    %s79 = sld [smem:[#allocation2]]
    %v80 = vsel %vm25, %v78, 0.0
    %vm81 = vcmask 7168
    %v82 = vsel %vm81, %v80, 0.0
    %83 = vadd.xlane.f32.xlu0 %v82
    %v84 = vpop.xlane.xlu0 %83
    %v85 = vrot.slane %v84, 4
    %v86 = vadd.f32 %v84, %v85
    %v87 = vrot.slane %v86, 2
    %v88 = vadd.f32 %v86, %v87
    %v89 = vrot.slane %v88, 1
    %v90 = vadd.f32 %v88, %v89
    %s91 = vtos %v90
    %s92 = sadd.f32 %s79, %s91
    %s93 = scalar_lea.smem [#allocation2], 0
    %94 = sst [smem:[%s93]] %s92
    // Predicated region
    $region14: #{tpu_custom_call.1} parent=1 // pred_check
      %p95 = pneg %p12
    $region15: #{tpu_custom_call.1} parent=1 // pred_check_branch
      %97 = sbr.rel (%p95) target = $region17
    $region16: #{tpu_custom_call.1} parent=1 // pred_region
      %s98 = sld [smem:[#allocation2]]
      %s99 = smul.f32 %s98, 0.125
      %s100 = scalar_lea.smem [#allocation3], 0
      %101 = sst [smem:[%s100]] %s99
    $region17: #{tpu_custom_call.1} parent=1 // pred_fallthru
      _
    // Predicated region
    $region18: #{tpu_custom_call.1} parent=1 // pred_check
      _
    $region19: #{tpu_custom_call.1} parent=1 // pred_check_branch
      %103 = sbr.rel (0) target = $region21
    $region20: #{tpu_custom_call.1} parent=1 // pred_region
      %s105 = ssub.s32 16, 16
      %106 = vsyncadd [#allocation4], %s105
      %109 = dma.smem_to_hbm [#allocation3], 16, %s2, [#allocation4]
    $region21: #{tpu_custom_call.1} parent=1 // pred_fallthru
      _
    // Predicated region
    $region22: #{tpu_custom_call.1} parent=1 // pred_check
      _
    $region23: #{tpu_custom_call.1} parent=1 // pred_check_branch
      %111 = sbr.rel (0) target = $region25
    $region24: #{tpu_custom_call.1} parent=1 // pred_region
      %112 = dma.done [#allocation4], 16
    $region25: #{tpu_custom_call.1} parent=1 // pred_fallthru
      _
    %113 = sfence
    %114 = vsyncpa [#allocation4], 1

</llo_original>
